<compile_context>
chip_gen: v5e
topology: v5e:2x2
jax: 0.10.0
libtpu: 0.0.40
codegen_flags: <defaults>
</compile_context>

<pallas_src>
import jax
import jax.numpy as jnp
from jax import lax
from jax.experimental import pallas as pl
from jax.experimental.pallas import tpu as pltpu


def _round_up(v, m):
    return ((v + m - 1) // m) * m


def linear_kernel(x_ref, w_ref, b_ref, o_ref):
    # x_ref: (TB, Fp), w_ref: (Cp, Fp)  [PyTorch layout], b_ref: (1, Cp), o_ref: (TB, Cp)
    acc = lax.dot_general(
        x_ref[...], w_ref[...],
        dimension_numbers=(((1,), (1,)), ((), ())),   # contract feature axis of both
        preferred_element_type=jnp.float32,
    )
    o_ref[...] = (acc + b_ref[...]).astype(o_ref.dtype)


def logistic_regression_forward(x, weight, bias, *, max_tile_rows=512):
    """Forward pass of LogisticRegression: y = x @ weight.T + bias.

    x:      (B, num_features) float32
    weight: (num_classes, num_features) float32  (PyTorch nn.Linear convention)
    bias:   (num_classes,) float32
    returns (B, num_classes) float32
    """
    B, F = x.shape
    C, F2 = weight.shape
    assert F == F2

    LANE, SUBLANE = 128, 8
    Fp = _round_up(F, LANE)   # MXU K dim
    Cp = _round_up(C, LANE)   # lane-dense output / MXU N dim

    # Pick the batch tile: as large as possible (amortize per-step overhead) but
    # sized so double-buffered x & out tiles + resident weight/bias stay under a
    # ~24 MiB VMEM budget (safe for v7x's smaller VMEM and default scoped limits).
    itemsize = jnp.dtype(x.dtype).itemsize
    budget = 24 * 1024 * 1024
    resident = Cp * Fp * itemsize + Cp * itemsize
    TB = min(_round_up(B, SUBLANE), max_tile_rows)
    while TB > SUBLANE and resident + 2 * TB * (Fp + Cp) * itemsize > budget:
        TB //= 2
    TB = max(SUBLANE, _round_up(TB, SUBLANE))

    Bp = _round_up(B, TB)

    # Zero-padding (in plain JAX glue) keeps the matmul result exact.
    xp = x if (Bp, Fp) == (B, F) else jnp.pad(x, ((0, Bp - B), (0, Fp - F)))
    wp = weight if (Cp, Fp) == (C, F) else jnp.pad(weight, ((0, Cp - C), (0, Fp - F)))
    bp = jnp.pad(bias, (0, Cp - C)).reshape(1, Cp)

    grid = (Bp // TB,)
    out = pl.pallas_call(
        linear_kernel,
        out_shape=jax.ShapeDtypeStruct((Bp, Cp), x.dtype),
        grid_spec=pl.GridSpec(
            grid=grid,
            in_specs=[
                pl.BlockSpec((TB, Fp), lambda i: (i, 0)),   # x: tiled over batch
                pl.BlockSpec((Cp, Fp), lambda i: (0, 0)),   # weight: resident in VMEM
                pl.BlockSpec((1, Cp), lambda i: (0, 0)),    # bias: resident in VMEM
            ],
            out_specs=pl.BlockSpec((TB, Cp), lambda i: (i, 0)),
        ),
        compiler_params=pltpu.CompilerParams(
            dimension_semantics=("parallel",),   # batch rows are independent
        ),
    )(xp, wp, bp)

    return out[:B, :C]


if __name__ == "__main__":
    key = jax.random.PRNGKey(0)

    def make_case(k, batch, num_features, num_classes):
        kx, kw, kb = jax.random.split(k, 3)
        bound = 1.0 / jnp.sqrt(jnp.float32(num_features))
        weight = jax.random.uniform(kw, (num_classes, num_features),
                                    dtype=jnp.float32, minval=-bound, maxval=bound)
        bias = jax.random.uniform(kb, (num_classes,),
                                  dtype=jnp.float32, minval=-bound, maxval=bound)
        x = jax.random.normal(kx, (batch, num_features), dtype=jnp.float32)
        return x, weight, bias

    k1, k2 = jax.random.split(key)

    # Case 1: small shapes matching the module spec.
    x, w, b = make_case(k1, batch=8, num_features=32, num_classes=16)
    y = jax.block_until_ready(logistic_regression_forward(x, w, b))
    y_ref = x @ w.T + b
    assert y.shape == (8, 16)
    assert jnp.allclose(y, y_ref, atol=1e-5, rtol=1e-5)

    # Case 2: non-aligned shapes to exercise the padding / batch-tiling path.
    x2, w2, b2 = make_case(k2, batch=200, num_features=40, num_classes=10)
    y2 = jax.block_until_ready(logistic_regression_forward(x2, w2, b2))
    y2_ref = x2 @ w2.T + b2
    assert y2.shape == (200, 10)
    assert jnp.allclose(y2, y2_ref, atol=1e-5, rtol=1e-5)

    print("KERNEL_OK")
</pallas_src>

<mosaic_0001>
module attributes {stable_mosaic.version = 11 : i64} {
  func.func @linear_kernel(%arg0: i32, %arg1: memref<8x128xf32, #tpu.memory_space<vmem>>, %arg2: memref<128x128xf32, #tpu.memory_space<vmem>>, %arg3: memref<1x128xf32, #tpu.memory_space<vmem>>, %arg4: memref<8x128xf32, #tpu.memory_space<vmem>>) attributes {dimension_semantics = [#tpu.dimension_semantics<parallel>], iteration_bounds = array<i64: 1>, scalar_prefetch = 0 : i64, scratch_operands = 0 : i64, tpu.core_type = #tpu.core_type<tc>, window_params = [{transform_indices = @transform_0, window_bounds = array<i64: 8, 128>}, {pipeline_mode = #tpu.pipeline_mode<synchronous>, transform_indices = @transform_1, window_bounds = array<i64: 128, 128>}, {pipeline_mode = #tpu.pipeline_mode<synchronous>, transform_indices = @transform_2, window_bounds = array<i64: 1, 128>}, {transform_indices = @transform_3, window_bounds = array<i64: 8, 128>}]} {
    %c0 = arith.constant 0 : index
    %c0_0 = arith.constant 0 : index
    %0 = vector.load %arg1[%c0, %c0_0] : memref<8x128xf32, #tpu.memory_space<vmem>>, vector<8x128xf32>
    %c0_1 = arith.constant 0 : index
    %c0_2 = arith.constant 0 : index
    %1 = vector.load %arg2[%c0_1, %c0_2] : memref<128x128xf32, #tpu.memory_space<vmem>>, vector<128x128xf32>
    %cst = arith.constant dense<0.000000e+00> : vector<8x128xf32>
    %2 = tpu.matmul %0, %1, %cst {dimension_numbers = #tpu.dot_dimension_numbers<[1], [1], [0], [0], [0, 0, 1, 0], [], []>} : vector<8x128xf32>, vector<128x128xf32>, vector<8x128xf32> -> vector<8x128xf32>
    %c0_3 = arith.constant 0 : index
    %c0_4 = arith.constant 0 : index
    %3 = vector.load %arg3[%c0_3, %c0_4] : memref<1x128xf32, #tpu.memory_space<vmem>>, vector<1x128xf32>
    %4 = vector.broadcast %3 : vector<1x128xf32> to vector<8x128xf32>
    %5 = arith.addf %2, %4 : vector<8x128xf32>
    %c0_5 = arith.constant 0 : index
    %c0_6 = arith.constant 0 : index
    %6 = vector.load %arg4[%c0_5, %c0_6] : memref<8x128xf32, #tpu.memory_space<vmem>>, vector<8x128xf32>
    tpu.vector_store %arg4[%c0_5, %c0_6], %5 {strides = array<i32>} : memref<8x128xf32, #tpu.memory_space<vmem>>, vector<8x128xf32>,
    return
  }
  func.func @transform_0(%arg0: i32) -> (i32, i32) {
    %c0_i32 = arith.constant 0 : i32
    %c0_i32_0 = arith.constant 0 : i32
    return %arg0, %c0_i32 : i32, i32
  }
  func.func @transform_1(%arg0: i32) -> (i32, i32) {
    %c0_i32 = arith.constant 0 : i32
    %c0_i32_0 = arith.constant 0 : i32
    %c0_i32_1 = arith.constant 0 : i32
    return %c0_i32, %c0_i32_0 : i32, i32
  }
  func.func @transform_2(%arg0: i32) -> (i32, i32) {
    %c0_i32 = arith.constant 0 : i32
    %c0_i32_0 = arith.constant 0 : i32
    %c0_i32_1 = arith.constant 0 : i32
    return %c0_i32, %c0_i32_0 : i32, i32
  }
  func.func @transform_3(%arg0: i32) -> (i32, i32) {
    %c0_i32 = arith.constant 0 : i32
    %c0_i32_0 = arith.constant 0 : i32
    return %arg0, %c0_i32 : i32, i32
  }
}

</mosaic_0001>

<llo_original>
// kernel: tpu_custom_call.1
$region0: #{tpu_custom_call.1}
  #allocation0 [shape = 'u32[]', space=smem, size = 0x4, offset = 0x4, fixed_abs, tag = 'smem constant byte address 0x4 - core index']
  #allocation1 [shape = 'u32[72,128]{1,0:T(1,128)}', space=vmem, size = 0x9000, scoped, tag = 'internal scratch']
  %s0 = inlined_call_operand.hbm [shape: f32[8,128], index: 0, kind: input, shape index: {}]
  %s1 = inlined_call_operand.hbm [shape: f32[128,128], index: 1, kind: input, shape index: {}]
  %s2 = inlined_call_operand.vmem [shape: f32[1,128], index: 2, kind: input, shape index: {}]
  %s3 = inlined_call_operand.hbm [shape: f32[8,128], index: 3, kind: output, shape index: {}]
  %s4 = sld [smem:[#allocation0]]
  $region30: #{tpu_custom_call.1} parent=0
    _
  %s6 = ssub.s32 1, %s4
  %s7 = scalar_select 0, %s6, %s4
  $region1: #{tpu_custom_call.1} parent=0
    #allocation2 [shape = 'u8[4096]{0}', space=vmem, size = 0x1000, scoped, tag = 'input window, operand 0, single buffered']
    #allocation3 [shape = 's32[1]{0}', space=sflag, size = 0x4, scoped, tag = 'scoped memory for tpu_custom_call.1']
    #allocation4 [shape = 's32[1]{0}', space=sflag, size = 0x4, scoped, tag = 'scoped memory for tpu_custom_call.1']
    #allocation5 [shape = 'u8[65536]{0}', space=vmem, size = 0x10000, scoped, tag = 'input window, operand 1, single buffered']
    #allocation6 [shape = 's32[1]{0}', space=sflag, size = 0x4, scoped, tag = 'scoped memory for tpu_custom_call.1']
    #allocation7 [shape = 'u8[4096]{0}', space=vmem, size = 0x1000, scoped, tag = 'output window, operand 0, single buffered']
    %8 = vsyncpa [#allocation3], 0
    %9 = vsyncpa [#allocation6], 0
    %10 = vsyncpa [#allocation4], 0
    // Predicated region
    $region2: #{tpu_custom_call.1} parent=1 // pred_check
      _
    $region3: #{tpu_custom_call.1} parent=1 // pred_check_branch
      %12 = sbr.rel (0) target = $region5
    $region4: #{tpu_custom_call.1} parent=1 // pred_region
      %14 = vsyncadd [#allocation3], 0
      %s16 = sshll.u32 %s0, 4
      %s17 = int_to_ptr.hbm [resolvable:$true] %s16
      %s18 = sshll.u32 [#allocation2], 4
      %s19 = int_to_ptr.vmem [resolvable:$true] %s18
      %21 = dma.hbm_to_vmem [thread:$0]  %s17, 128, %s19, [#allocation3]
    $region5: #{tpu_custom_call.1} parent=1 // pred_fallthru
      _
    // Predicated region
    $region6: #{tpu_custom_call.1} parent=1 // pred_check
      _
    $region7: #{tpu_custom_call.1} parent=1 // pred_check_branch
      %23 = sbr.rel (0) target = $region9
    $region8: #{tpu_custom_call.1} parent=1 // pred_region
      %25 = vsyncadd [#allocation6], 0
      %s26 = sshll.u32 %s1, 4
      %s27 = int_to_ptr.hbm [resolvable:$true] %s26
      %s28 = sshll.u32 [#allocation5], 4
      %s29 = int_to_ptr.vmem [resolvable:$true] %s28
      %34 = dma.hbm_to_vmem [thread:$0]  %s27, 2048, %s29, [#allocation6], 128, 128, 8
    $region9: #{tpu_custom_call.1} parent=1 // pred_fallthru
      _
    // Predicated region
    $region10: #{tpu_custom_call.1} parent=1 // pred_check
      _
    $region11: #{tpu_custom_call.1} parent=1 // pred_check_branch
      %36 = sbr.rel (0) target = $region13
    $region12: #{tpu_custom_call.1} parent=1 // pred_region
      _
    $region13: #{tpu_custom_call.1} parent=1 // pred_fallthru
      _
    // Predicated region
    $region14: #{tpu_custom_call.1} parent=1 // pred_check
      _
    $region15: #{tpu_custom_call.1} parent=1 // pred_check_branch
      %38 = sbr.rel (0) target = $region17
    $region16: #{tpu_custom_call.1} parent=1 // pred_region
      %40 = dma.done [#allocation3], 128
    $region17: #{tpu_custom_call.1} parent=1 // pred_fallthru
      _
    // Predicated region
    $region18: #{tpu_custom_call.1} parent=1 // pred_check
      _
    $region19: #{tpu_custom_call.1} parent=1 // pred_check_branch
      %42 = sbr.rel (0) target = $region21
    $region20: #{tpu_custom_call.1} parent=1 // pred_region
      %44 = dma.done [#allocation6], 2048
    $region21: #{tpu_custom_call.1} parent=1 // pred_fallthru
      _
    %v45 = vld [vmem:[#allocation2] sm:$0xff]
    %v46 = vld [vmem:[#allocation5] sm:$0xff]
    %v47 = vld [vmem:[#allocation5 + $0x8] sm:$0xff]
    %v48 = vld [vmem:[#allocation5 + $0x10] sm:$0xff]
    %v49 = vld [vmem:[#allocation5 + $0x18] sm:$0xff]
    %v50 = vld [vmem:[#allocation5 + $0x20] sm:$0xff]
    %v51 = vld [vmem:[#allocation5 + $0x28] sm:$0xff]
    %v52 = vld [vmem:[#allocation5 + $0x30] sm:$0xff]
    %v53 = vld [vmem:[#allocation5 + $0x38] sm:$0xff]
    %v54 = vld [vmem:[#allocation5 + $0x40] sm:$0xff]
    %v55 = vld [vmem:[#allocation5 + $0x48] sm:$0xff]
    %v56 = vld [vmem:[#allocation5 + $0x50] sm:$0xff]
    %v57 = vld [vmem:[#allocation5 + $0x58] sm:$0xff]
    %v58 = vld [vmem:[#allocation5 + $0x60] sm:$0xff]
    %v59 = vld [vmem:[#allocation5 + $0x68] sm:$0xff]
    %v60 = vld [vmem:[#allocation5 + $0x70] sm:$0xff]
    %v61 = vld [vmem:[#allocation5 + $0x78] sm:$0xff]
    %v62 = vld [vmem:[%s2] sm:$0x1]
    %v64 = vperm.slane %v62, 0
    %66 = vmatpush.xpose.msra.mxu0 %v61
    %67 = vmatpush.xpose.msra.mxu0 %v60
    %68 = vmatpush.xpose.msra.mxu0 %v59
    %69 = vmatpush.xpose.msra.mxu0 %v58
    %70 = vmatpush.xpose.msra.mxu0 %v57
    %71 = vmatpush.xpose.msra.mxu0 %v56
    %72 = vmatpush.xpose.msra.mxu0 %v55
    %73 = vmatpush.xpose.msra.mxu0 %v54
    %74 = vmatpush.xpose.msra.mxu0 %v53
    %75 = vmatpush.xpose.msra.mxu0 %v52
    %76 = vmatpush.xpose.msra.mxu0 %v51
    %77 = vmatpush.xpose.msra.mxu0 %v50
    %78 = vmatpush.xpose.msra.mxu0 %v49
    %79 = vmatpush.xpose.msra.mxu0 %v48
    %80 = vmatpush.xpose.msra.mxu0 %v47
    %81 = vmatpush.xpose.msra.mxu0 %v46
    %82 = vmatmul.f32.gmra.mxu0 %v45
    %v83 = vpop.f32.mrf.mxu0
    %v84 = vadd.f32 %v64, %v83
    %85 = vdwg.mxu0
    %86 = vst [vmem:[#allocation7] sm:$0xff] %v84
    // Predicated region
    $region22: #{tpu_custom_call.1} parent=1 // pred_check
      _
    $region23: #{tpu_custom_call.1} parent=1 // pred_check_branch
      %88 = sbr.rel (0) target = $region25
    $region24: #{tpu_custom_call.1} parent=1 // pred_region
      %90 = vsyncadd [#allocation4], 0
      %s92 = sshll.u32 [#allocation7], 4
      %s93 = int_to_ptr.vmem [resolvable:$true] %s92
      %s94 = sshll.u32 %s3, 4
      %s95 = int_to_ptr.hbm [resolvable:$true] %s94
      %97 = dma.vmem_to_hbm [thread:$0]  %s93, 128, %s95, [#allocation4]
    $region25: #{tpu_custom_call.1} parent=1 // pred_fallthru
      _
    // Predicated region
    $region26: #{tpu_custom_call.1} parent=1 // pred_check
      _
    $region27: #{tpu_custom_call.1} parent=1 // pred_check_branch
      %99 = sbr.rel (0) target = $region29
    $region28: #{tpu_custom_call.1} parent=1 // pred_region
      %101 = dma.done [#allocation4], 128
    $region29: #{tpu_custom_call.1} parent=1 // pred_fallthru
      _
    %102 = vsyncpa [#allocation3], 1
    %103 = vsyncpa [#allocation6], 1
    %104 = vsyncpa [#allocation4], 1

</llo_original>
